<compile_context>
chip_gen: v6e
topology: v6e:2x2x1
jax: 0.10.0
libtpu: 0.0.40
codegen_flags: <defaults>
</compile_context>

<pallas_src>
import jax
import jax.numpy as jnp
from jax.experimental import pallas as pl
from jax.experimental.pallas import tpu as pltpu


def _make_mixing_kernel(n_ctx: int, kernel_size: int, decay_pow: int) -> jnp.ndarray:
    """Deterministic buffer: k = tril(ones).triu(-kernel_size); k /= (cumsum(k, -2)**p + 1)."""
    i = jnp.arange(n_ctx)[:, None]
    j = jnp.arange(n_ctx)[None, :]
    k = ((j <= i) & (j >= i - kernel_size)).astype(jnp.float32)
    k = k / (jnp.cumsum(k, axis=0) ** decay_pow + 1.0)
    return k


def _make_sgu_kernel(tb: int, unroll_threshold: int = 8):
    """Kernel over one (TB, N, D) batch tile.

    For each batch element t in the tile:
      LayerNorm(x[t]) over the channel axis (two-pass, f32 stats), then
      out[t] = K @ xn[t] on the MXU (f32 accumulation).
    """

    def kernel(x_ref, k_ref, g_ref, b_ref, o_ref):
        k = k_ref[...]                              # (N, N), activation dtype
        gamma = g_ref[...].astype(jnp.float32)      # (1, D)
        beta = b_ref[...].astype(jnp.float32)       # (1, D)

        def one(t):
            xt = x_ref[t].astype(jnp.float32)       # (N, D)
            mean = jnp.mean(xt, axis=-1, keepdims=True)
            xc = xt - mean
            var = jnp.mean(xc * xc, axis=-1, keepdims=True)
            xn = xc * jax.lax.rsqrt(var + 1e-5)
            xn = xn * gamma + beta
            out = jnp.dot(k, xn.astype(k.dtype),
                          preferred_element_type=jnp.float32)
            o_ref[t] = out.astype(o_ref.dtype)

        if tb <= unroll_threshold:
            for t in range(tb):                     # small static unroll
                one(t)
        else:
            @pl.loop(0, tb)
            def _(t):
                one(t)

    return kernel


def _tpu_vmem_capacity_bytes() -> int:
    """Physical VMEM per core; conservative 64 MiB (v7x) if the query fails."""
    try:
        info = pltpu.get_tpu_info()
        for name in ("vmem_capacity_bytes", "vmem_bytes", "vmem_size_bytes"):
            v = getattr(info, name, None)
            if v:
                return int(v)
    except Exception:
        pass
    return 64 << 20


def _choose_block_batch(B, N, D, x_itemsize, k_itemsize,
                        target_tile_bytes, vmem_budget):
    """Largest divisor TB of B that (a) keeps >=2 grid steps when B >= 2,
    (b) keeps the input tile under the per-chip tile target, and (c) keeps the
    estimated live VMEM set under the budget."""
    divisors = sorted((tb for tb in range(1, B + 1) if B % tb == 0), reverse=True)

    def vmem_cost(tb):
        io = 4 * tb * N * D * x_itemsize        # double-buffered in + out tiles
        temps = 8 * N * D * 4                   # per-row f32 temporaries
        kbuf = 3 * N * N * k_itemsize           # K: 2 pipeline buffers + loaded value
        return io + temps + kbuf + (2 << 20)    # headroom

    for tb in divisors:
        if B >= 2 and B // tb < 2:
            continue                            # keep both v7x TensorCores busy
        if tb * N * D * x_itemsize <= target_tile_bytes and vmem_cost(tb) <= vmem_budget:
            return tb, vmem_cost(tb)
    return 1, vmem_cost(1)


def static_sgu(x, mixing_kernel, ln_weight, ln_bias):
    """x: (B, N, D); mixing_kernel: (N, N); ln_weight/ln_bias: (D,)."""
    B, N, D = x.shape
    x_dt = x.dtype
    x_itemsize = jnp.dtype(x_dt).itemsize

    # MXU operands follow the activation dtype (bf16 in -> bf16 MXU, f32 acc).
    k = mixing_kernel.astype(x_dt)
    k_itemsize = jnp.dtype(k.dtype).itemsize
    gamma = jnp.reshape(ln_weight, (1, D)).astype(jnp.float32)
    beta = jnp.reshape(ln_bias, (1, D)).astype(jnp.float32)

    # Per-chip sizing: smaller tiles / tighter cap on 64-MiB-VMEM parts (v7x).
    vmem_cap = _tpu_vmem_capacity_bytes()
    if vmem_cap <= (64 << 20):
        target_tile_bytes, vmem_ceiling = (2 << 20), (40 << 20)
    else:
        target_tile_bytes, vmem_ceiling = (8 << 20), (96 << 20)

    TB, vmem_need = _choose_block_batch(
        B, N, D, x_itemsize, k_itemsize, target_tile_bytes, vmem_ceiling)
    vmem_limit = int(min(max(vmem_need, 16 << 20), vmem_ceiling))

    grid = (B // TB,)
    kernel = _make_sgu_kernel(TB)

    out = pl.pallas_call(
        kernel,
        out_shape=jax.ShapeDtypeStruct((B, N, D), x_dt),
        grid_spec=pl.GridSpec(
            grid=grid,
            in_specs=[
                pl.BlockSpec((TB, N, D), lambda b: (b, 0, 0)),   # x batch tile
                pl.BlockSpec((N, N), lambda b: (0, 0)),          # mixing kernel (shared)
                pl.BlockSpec((1, D), lambda b: (0, 0)),          # LN gamma
                pl.BlockSpec((1, D), lambda b: (0, 0)),          # LN beta
            ],
            out_specs=pl.BlockSpec((TB, N, D), lambda b: (b, 0, 0)),
        ),
        compiler_params=pltpu.CompilerParams(
            dimension_semantics=("parallel",),
            vmem_limit_bytes=vmem_limit,
        ),
    )(x, k, gamma, beta)
    return out


def static_sgu_ref(x, mixing_kernel, ln_weight, ln_bias):
    """Pure-JAX reference matching the PyTorch module."""
    x32 = x.astype(jnp.float32)
    mean = jnp.mean(x32, axis=-1, keepdims=True)
    var = jnp.mean((x32 - mean) ** 2, axis=-1, keepdims=True)
    xn = (x32 - mean) * jax.lax.rsqrt(var + 1e-5)
    xn = xn * jnp.reshape(ln_weight, (1, 1, -1)) + jnp.reshape(ln_bias, (1, 1, -1))
    out = jnp.einsum("nm,bmd->bnd", mixing_kernel.astype(jnp.float32), xn,
                     precision=jax.lax.Precision.HIGHEST)
    return out.astype(x.dtype)


if __name__ == "__main__":
    # Module config (small): n_ctx=16 tokens, embedding_dim=8 -> D = 4*8 = 32
    n_ctx = 16
    embedding_dim = 8
    kernel_size = 4
    decay_pow = 2
    D = 4 * embedding_dim
    B = 2

    # Deterministic parameters (per _weights_init: LayerNorm weight=1, bias=0)
    mixing_kernel = _make_mixing_kernel(n_ctx, kernel_size, decay_pow)
    ln_weight = jnp.ones((D,), jnp.float32)
    ln_bias = jnp.zeros((D,), jnp.float32)

    key = jax.random.PRNGKey(0)
    x = jax.random.normal(key, (B, n_ctx, D), dtype=jnp.float32)

    out = static_sgu(x, mixing_kernel, ln_weight, ln_bias)
    out = jax.block_until_ready(out)

    ref = static_sgu_ref(x, mixing_kernel, ln_weight, ln_bias)
    assert out.shape == (B, n_ctx, D)
    assert jnp.allclose(out, ref, atol=2e-5, rtol=2e-5), "mismatch vs reference"

    print("KERNEL_OK")
</pallas_src>

<mosaic_0001>
module attributes {stable_mosaic.version = 11 : i64} {
  func.func @kernel(%arg0: i32, %arg1: memref<1x16x32xf32, #tpu.memory_space<vmem>>, %arg2: memref<16x16xf32, #tpu.memory_space<vmem>>, %arg3: memref<1x32xf32, #tpu.memory_space<vmem>>, %arg4: memref<1x32xf32, #tpu.memory_space<vmem>>, %arg5: memref<1x16x32xf32, #tpu.memory_space<vmem>>) attributes {dimension_semantics = [#tpu.dimension_semantics<parallel>], iteration_bounds = array<i64: 2>, scalar_prefetch = 0 : i64, scratch_operands = 0 : i64, tpu.core_type = #tpu.core_type<tc>, window_params = [{transform_indices = @transform_0, window_bounds = array<i64: 1, 16, 32>}, {pipeline_mode = #tpu.pipeline_mode<synchronous>, transform_indices = @transform_1, window_bounds = array<i64: 16, 16>}, {pipeline_mode = #tpu.pipeline_mode<synchronous>, transform_indices = @transform_2, window_bounds = array<i64: 1, 32>}, {pipeline_mode = #tpu.pipeline_mode<synchronous>, transform_indices = @transform_3, window_bounds = array<i64: 1, 32>}, {transform_indices = @transform_4, window_bounds = array<i64: 1, 16, 32>}]} {
    %c0 = arith.constant 0 : index
    %c0_0 = arith.constant 0 : index
    %0 = vector.load %arg2[%c0, %c0_0] : memref<16x16xf32, #tpu.memory_space<vmem>>, vector<16x16xf32>
    %c0_1 = arith.constant 0 : index
    %c0_2 = arith.constant 0 : index
    %1 = vector.load %arg3[%c0_1, %c0_2] : memref<1x32xf32, #tpu.memory_space<vmem>>, vector<1x32xf32>
    %c0_3 = arith.constant 0 : index
    %c0_4 = arith.constant 0 : index
    %2 = vector.load %arg4[%c0_3, %c0_4] : memref<1x32xf32, #tpu.memory_space<vmem>>, vector<1x32xf32>
    %c0_5 = arith.constant 0 : index
    %c0_6 = arith.constant 0 : index
    %c0_7 = arith.constant 0 : index
    %3 = vector.load %arg1[%c0_5, %c0_6, %c0_7] : memref<1x16x32xf32, #tpu.memory_space<vmem>>, vector<1x16x32xf32>
    %4 = vector.shape_cast %3 : vector<1x16x32xf32> to vector<16x32xf32>
    %cst = arith.constant dense<0.000000e+00> : vector<16xf32>
    %5 = vector.multi_reduction <add>, %4, %cst [1] : vector<16x32xf32> to vector<16xf32>
    %6 = vector.shape_cast %5 : vector<16xf32> to vector<16x1xf32>
    %cst_8 = arith.constant 3.200000e+01 : f32
    %7 = vector.broadcast %cst_8 : f32 to vector<16x1xf32>
    %8 = arith.divf %6, %7 : vector<16x1xf32>
    %9 = vector.broadcast %8 : vector<16x1xf32> to vector<16x32xf32>
    %10 = arith.subf %4, %9 : vector<16x32xf32>
    %11 = arith.mulf %10, %10 : vector<16x32xf32>
    %cst_9 = arith.constant dense<0.000000e+00> : vector<16xf32>
    %12 = vector.multi_reduction <add>, %11, %cst_9 [1] : vector<16x32xf32> to vector<16xf32>
    %13 = vector.shape_cast %12 : vector<16xf32> to vector<16x1xf32>
    %cst_10 = arith.constant 3.200000e+01 : f32
    %14 = vector.broadcast %cst_10 : f32 to vector<16x1xf32>
    %15 = arith.divf %13, %14 : vector<16x1xf32>
    %cst_11 = arith.constant 9.99999974E-6 : f32
    %16 = vector.broadcast %cst_11 : f32 to vector<16x1xf32>
    %17 = arith.addf %15, %16 : vector<16x1xf32>
    %18 = math.rsqrt %17 : vector<16x1xf32>
    %19 = vector.broadcast %18 : vector<16x1xf32> to vector<16x32xf32>
    %20 = arith.mulf %10, %19 : vector<16x32xf32>
    %21 = vector.broadcast %1 : vector<1x32xf32> to vector<16x32xf32>
    %22 = arith.mulf %20, %21 : vector<16x32xf32>
    %23 = vector.broadcast %2 : vector<1x32xf32> to vector<16x32xf32>
    %24 = arith.addf %22, %23 : vector<16x32xf32>
    %cst_12 = arith.constant dense<0.000000e+00> : vector<16x32xf32>
    %25 = tpu.matmul %0, %24, %cst_12 {dimension_numbers = #tpu.dot_dimension_numbers<[1], [0], [0], [1], [0, 0, 1, 1], [], []>} : vector<16x16xf32>, vector<16x32xf32>, vector<16x32xf32> -> vector<16x32xf32>
    %c0_13 = arith.constant 0 : index
    %c0_14 = arith.constant 0 : index
    %c0_15 = arith.constant 0 : index
    %26 = vector.load %arg5[%c0_13, %c0_14, %c0_15] : memref<1x16x32xf32, #tpu.memory_space<vmem>>, vector<1x16x32xf32>
    %27 = vector.shape_cast %26 : vector<1x16x32xf32> to vector<16x32xf32>
    %28 = vector.shape_cast %25 : vector<16x32xf32> to vector<1x16x32xf32>
    tpu.vector_store %arg5[%c0_13, %c0_14, %c0_15], %28 {strides = array<i32>} : memref<1x16x32xf32, #tpu.memory_space<vmem>>, vector<1x16x32xf32>,
    return
  }
  func.func @transform_0(%arg0: i32) -> (i32, i32, i32) {
    %c0_i32 = arith.constant 0 : i32
    %c0_i32_0 = arith.constant 0 : i32
    %c0_i32_1 = arith.constant 0 : i32
    return %arg0, %c0_i32, %c0_i32_0 : i32, i32, i32
  }
  func.func @transform_1(%arg0: i32) -> (i32, i32) {
    %c0_i32 = arith.constant 0 : i32
    %c0_i32_0 = arith.constant 0 : i32
    %c0_i32_1 = arith.constant 0 : i32
    return %c0_i32, %c0_i32_0 : i32, i32
  }
  func.func @transform_2(%arg0: i32) -> (i32, i32) {
    %c0_i32 = arith.constant 0 : i32
    %c0_i32_0 = arith.constant 0 : i32
    %c0_i32_1 = arith.constant 0 : i32
    return %c0_i32, %c0_i32_0 : i32, i32
  }
  func.func @transform_3(%arg0: i32) -> (i32, i32) {
    %c0_i32 = arith.constant 0 : i32
    %c0_i32_0 = arith.constant 0 : i32
    %c0_i32_1 = arith.constant 0 : i32
    return %c0_i32, %c0_i32_0 : i32, i32
  }
  func.func @transform_4(%arg0: i32) -> (i32, i32, i32) {
    %c0_i32 = arith.constant 0 : i32
    %c0_i32_0 = arith.constant 0 : i32
    %c0_i32_1 = arith.constant 0 : i32
    return %arg0, %c0_i32, %c0_i32_0 : i32, i32, i32
  }
}

</mosaic_0001>

<llo_original>
// kernel: tpu_custom_call.1
$region0: #{tpu_custom_call.1}
  #allocation0 [shape = 'u32[]', space=smem, size = 0x4, offset = 0x4, fixed_abs, tag = 'smem constant byte address 0x4 - core index']
  #allocation1 [shape = 'u32[144,128]{1,0:T(1,128)}', space=vmem, size = 0x12000, scoped, tag = 'internal scratch']
  %s0 = inlined_call_operand.hbm [shape: f32[2,16,32], index: 0, kind: input, shape index: {}]
  %s1 = inlined_call_operand.hbm [shape: f32[16,16], index: 1, kind: input, shape index: {}]
  %s2 = inlined_call_operand.vmem [shape: f32[1,32], index: 2, kind: input, shape index: {}]
  %s3 = inlined_call_operand.vmem [shape: f32[1,32], index: 3, kind: input, shape index: {}]
  %s4 = inlined_call_operand.hbm [shape: f32[2,16,32], index: 4, kind: output, shape index: {}]
  %s5 = sld [smem:[#allocation0]]
  $region57: #{tpu_custom_call.1} parent=0
    _
  %s7 = ssub.s32 1, %s5
  %s8 = scalar_select 0, %s7, %s5
  $region1: #{tpu_custom_call.1} parent=0
    #allocation2 [shape = 'u8[16384]{0}', space=vmem, size = 0x4000, scoped, tag = 'input window, operand 0']
    #allocation3 [shape = 's32[2]{0}', space=sflag, size = 0x8, scoped, tag = 'scoped memory for tpu_custom_call.1']
    #allocation4 [shape = 's32[2]{0}', space=sflag, size = 0x8, scoped, tag = 'scoped memory for tpu_custom_call.1']
    #allocation5 [shape = 'u8[8192]{0}', space=vmem, size = 0x2000, scoped, tag = 'input window, operand 1, single buffered']
    #allocation6 [shape = 's32[1]{0}', space=sflag, size = 0x4, scoped, tag = 'scoped memory for tpu_custom_call.1']
    #allocation7 [shape = 'u8[16384]{0}', space=vmem, size = 0x4000, scoped, tag = 'output window, operand 0']
    %9 = vsyncpa [#allocation3], 0
    %s10 = scalar_lea.sflag [#allocation3], 1
    %11 = vsyncpa %s10, 0
    %12 = vsyncpa [#allocation6], 0
    %13 = vsyncpa [#allocation4], 0
    %s14 = scalar_lea.sflag [#allocation4], 1
    %15 = vsyncpa %s14, 0
    loop: start=0, step=1, limit=4
    $region2: #{tpu_custom_call.1} parent=1 // loop_pre_header
      _
    $region3: #{tpu_custom_call.1} parent=1 // loop_header
      %s17 = sphi 0, %s21
      %p18 = scmp.ge.s32.totalorder %s17, 4
      %s27 = sphi 0, %s29
      %s30 = sphi 0, %s27
      %s31 = sphi 0, %s30
      %s47 = sphi 0, %s31
      %s51 = sphi 0, %s51
      %s53 = sphi 0, %s51
      %s54 = sphi 0, %s53
      %s68 = sphi 0, %s54
      %s72 = sphi 0, %s72
      %s74 = sphi 0, %s72
      %s75 = sphi 0, %s74
      %s89 = sphi 0, %s75
      %s93 = sphi 0, %s93
      %s95 = sphi 0, %s93
      %s96 = sphi 0, %s95
      %s110 = sphi 0, %s96
      %s116 = sphi 0, %s118
      %s119 = sphi 0, %s116
      %s120 = sphi 0, %s119
      %s136 = sphi 0, %s120
    $region4: #{tpu_custom_call.1} parent=1 // loop_header_branch
      %20 = sbr.rel (%p18) target = $region8
    $region5: #{tpu_custom_call.1} parent=1 // loop_body
      %s22 = ssub.s32 %s17, 1
      %s23 = ssub.s32 %s17, 2
      %s24 = sadd.s32 %s17, 1
      %s25 = ssub.s32 %s17, %s24
      %p26 = scmp.eq.s32.totalorder %s25, 0
      %s28 = sadd.s32 %s27, 1
      %s29 = scalar_select %p26, %s27, %s28
      %p32 = pneg %p26
      %p33 = scmp.eq.s32.totalorder %s17, 1
      %p34 = por %p32, %p33
      %p35 = scmp.ne.s32.totalorder %s27, %s30
      %p36 = scmp.eq.s32.totalorder %s17, 0
      %p37 = por %p35, %p36
      %p38 = scmp.ne.s32.totalorder %s27, %s30
      %p39 = scmp.eq.s32.totalorder %s22, 1
      %p40 = por %p38, %p39
      %p41 = scmp.ne.s32.totalorder %s30, %s31
      %p42 = scmp.eq.s32.totalorder %s22, 0
      %p43 = por %p41, %p42
      %p44 = scmp.ne.s32.totalorder %s30, %s31
      %p45 = scmp.eq.s32.totalorder %s23, 1
      %p46 = por %p44, %p45
      %p48 = scmp.ne.s32.totalorder %s31, %s47
      %p49 = scmp.eq.s32.totalorder %s23, 0
      %p50 = por %p48, %p49
      %s52 = sadd.s32 %s51, 1
      %p55 = scmp.eq.s32.totalorder %s17, 1
      %p56 = scmp.ne.s32.totalorder %s51, %s53
      %p57 = scmp.eq.s32.totalorder %s17, 0
      %p58 = por %p56, %p57
      %p59 = scmp.ne.s32.totalorder %s51, %s53
      %p60 = scmp.eq.s32.totalorder %s22, 1
      %p61 = por %p59, %p60
      %p62 = scmp.ne.s32.totalorder %s53, %s54
      %p63 = scmp.eq.s32.totalorder %s22, 0
      %p64 = por %p62, %p63
      %p65 = scmp.ne.s32.totalorder %s53, %s54
      %p66 = scmp.eq.s32.totalorder %s23, 1
      %p67 = por %p65, %p66
      %p69 = scmp.ne.s32.totalorder %s54, %s68
      %p70 = scmp.eq.s32.totalorder %s23, 0
      %p71 = por %p69, %p70
      %s73 = sadd.s32 %s72, 1
      %p76 = scmp.eq.s32.totalorder %s17, 1
      %p77 = scmp.ne.s32.totalorder %s72, %s74
      %p78 = scmp.eq.s32.totalorder %s17, 0
      %p79 = por %p77, %p78
      %p80 = scmp.ne.s32.totalorder %s72, %s74
      %p81 = scmp.eq.s32.totalorder %s22, 1
      %p82 = por %p80, %p81
      %p83 = scmp.ne.s32.totalorder %s74, %s75
      %p84 = scmp.eq.s32.totalorder %s22, 0
      %p85 = por %p83, %p84
      %p86 = scmp.ne.s32.totalorder %s74, %s75
      %p87 = scmp.eq.s32.totalorder %s23, 1
      %p88 = por %p86, %p87
      %p90 = scmp.ne.s32.totalorder %s75, %s89
      %p91 = scmp.eq.s32.totalorder %s23, 0
      %p92 = por %p90, %p91
      %s94 = sadd.s32 %s93, 1
      %p97 = scmp.eq.s32.totalorder %s17, 1
      %p98 = scmp.ne.s32.totalorder %s93, %s95
      %p99 = scmp.eq.s32.totalorder %s17, 0
      %p100 = por %p98, %p99
      %p101 = scmp.ne.s32.totalorder %s93, %s95
      %p102 = scmp.eq.s32.totalorder %s22, 1
      %p103 = por %p101, %p102
      %p104 = scmp.ne.s32.totalorder %s95, %s96
      %p105 = scmp.eq.s32.totalorder %s22, 0
      %p106 = por %p104, %p105
      %p107 = scmp.ne.s32.totalorder %s95, %s96
      %p108 = scmp.eq.s32.totalorder %s23, 1
      %p109 = por %p107, %p108
      %p111 = scmp.ne.s32.totalorder %s96, %s110
      %p112 = scmp.eq.s32.totalorder %s23, 0
      %p113 = por %p111, %p112
      %s114 = ssub.s32 %s17, %s24
      %p115 = scmp.eq.s32.totalorder %s114, 0
      %s117 = sadd.s32 %s116, 1
      %s118 = scalar_select %p115, %s116, %s117
      %p121 = pneg %p115
      %p122 = scmp.eq.s32.totalorder %s17, 1
      %p123 = por %p121, %p122
      %p124 = scmp.ne.s32.totalorder %s116, %s119
      %p125 = scmp.eq.s32.totalorder %s17, 0
      %p126 = por %p124, %p125
      %p127 = scmp.ne.s32.totalorder %s116, %s119
      %p128 = scmp.eq.s32.totalorder %s22, 1
      %p129 = por %p127, %p128
      %p130 = scmp.ne.s32.totalorder %s119, %s120
      %p131 = scmp.eq.s32.totalorder %s22, 0
      %p132 = por %p130, %p131
      %p133 = scmp.ne.s32.totalorder %s119, %s120
      %p134 = scmp.eq.s32.totalorder %s23, 1
      %p135 = por %p133, %p134
      %p137 = scmp.ne.s32.totalorder %s120, %s136
      %p138 = scmp.eq.s32.totalorder %s23, 0
      %p139 = por %p137, %p138
      %p140 = scmp.le.s32.totalorder 1, %s17
      %p141 = scmp.lt.s32.totalorder %s17, 3
      %p142 = pnand %p140, %p141
      %p143 = pneg %p142
      // Predicated region
      $region9: #{tpu_custom_call.1} parent=5 // pred_check
        _
      $region10: #{tpu_custom_call.1} parent=5 // pred_check_branch
        %145 = sbr.rel (%p142) target = $region12
      $region11: #{tpu_custom_call.1} parent=5 // pred_region
        %s146 = ssub.s32 %s17, 1
        // Predicated region
        $region13: #{tpu_custom_call.1} parent=11 // pred_check
          %p147 = pneg %p64
        $region14: #{tpu_custom_call.1} parent=11 // pred_check_branch
          %149 = sbr.rel (%p147) target = $region16
        $region15: #{tpu_custom_call.1} parent=11 // pred_region
          %s151 = ssub.s32 256, 256
          %152 = vsyncadd [#allocation6], %s151
          %s153 = sshll.u32 [#allocation5], 4
          %s154 = int_to_ptr.vmem [resolvable:$true] %s153
          %159 = dma.hbm_to_vmem [thread:$0]  %s1, 256, %s154, [#allocation6], 128, 128, 8
        $region16: #{tpu_custom_call.1} parent=11 // pred_fallthru
          _
        // Predicated region
        $region17: #{tpu_custom_call.1} parent=11 // pred_check
          %p160 = pneg %p85
        $region18: #{tpu_custom_call.1} parent=11 // pred_check_branch
          %162 = sbr.rel (%p160) target = $region20
        $region19: #{tpu_custom_call.1} parent=11 // pred_region
          _
        $region20: #{tpu_custom_call.1} parent=11 // pred_fallthru
          _
        // Predicated region
        $region21: #{tpu_custom_call.1} parent=11 // pred_check
          %p163 = pneg %p106
        $region22: #{tpu_custom_call.1} parent=11 // pred_check_branch
          %165 = sbr.rel (%p163) target = $region24
        $region23: #{tpu_custom_call.1} parent=11 // pred_region
          _
        $region24: #{tpu_custom_call.1} parent=11 // pred_fallthru
          _
      $region12: #{tpu_custom_call.1} parent=5 // pred_fallthru
        _
      %p166 = scmp.lt.s32.totalorder %s17, 2
      // Predicated region
      $region25: #{tpu_custom_call.1} parent=5 // pred_check
        %p167 = pneg %p166
      $region26: #{tpu_custom_call.1} parent=5 // pred_check_branch
        %169 = sbr.rel (%p167) target = $region28
      $region27: #{tpu_custom_call.1} parent=5 // pred_region
        // Predicated region
        $region29: #{tpu_custom_call.1} parent=27 // pred_check
          %p170 = pneg %p37
        $region30: #{tpu_custom_call.1} parent=27 // pred_check_branch
          %172 = sbr.rel (%p170) target = $region32
        $region31: #{tpu_custom_call.1} parent=27 // pred_region
          %s173 = sand.u32 %s27, 1
          %s174 = scalar_lea.sflag [#allocation3], %s173
          %s175 = sand.u32 %s27, 1
          %s176 = smul.addr %s175, 16
          %s177 = scalar_lea.vmem [#allocation2], %s176
          %s179 = ssub.s32 256, 256
          %180 = vsyncadd %s174, %s179
          %s181 = smul.addr %s17, 2
          %s182 = smul.addr %s181, 128
          %s183 = scalar_lea.hbm %s0, %s182
          %s184 = sshll.u32 %s177, 4
          %s185 = int_to_ptr.vmem [resolvable:$true] %s184
          %190 = dma.hbm_to_vmem [thread:$0]  %s183, 256, %s185, %s174, 128, 128, 8
        $region32: #{tpu_custom_call.1} parent=27 // pred_fallthru
          _
      $region28: #{tpu_custom_call.1} parent=5 // pred_fallthru
        _
      %p191 = scmp.le.s32.totalorder 1, %s17
      %p192 = scmp.lt.s32.totalorder %s17, 3
      %p193 = pnand %p191, %p192
      %p194 = pneg %p193
      // Predicated region
      $region33: #{tpu_custom_call.1} parent=5 // pred_check
        _
      $region34: #{tpu_custom_call.1} parent=5 // pred_check_branch
        %196 = sbr.rel (%p193) target = $region36
      $region35: #{tpu_custom_call.1} parent=5 // pred_region
        %s197 = ssub.s32 %s17, 1
        %s198 = sand.u32 %s30, 1
        %s199 = scalar_lea.sflag [#allocation3], %s198
        %s200 = sand.u32 %s30, 1
        %s201 = smul.addr %s200, 16
        %s202 = scalar_lea.vmem [#allocation2], %s201
        // Predicated region
        $region37: #{tpu_custom_call.1} parent=35 // pred_check
          %p203 = pneg %p43
        $region38: #{tpu_custom_call.1} parent=35 // pred_check_branch
          %205 = sbr.rel (%p203) target = $region40
        $region39: #{tpu_custom_call.1} parent=35 // pred_region
          %206 = dma.done %s199, 256
        $region40: #{tpu_custom_call.1} parent=35 // pred_fallthru
          _
        // Predicated region
        $region41: #{tpu_custom_call.1} parent=35 // pred_check
          %p207 = pneg %p64
        $region42: #{tpu_custom_call.1} parent=35 // pred_check_branch
          %209 = sbr.rel (%p207) target = $region44
        $region43: #{tpu_custom_call.1} parent=35 // pred_region
          %210 = dma.done [#allocation6], 256
        $region44: #{tpu_custom_call.1} parent=35 // pred_fallthru
          _
        %s211 = sand.u32 %s30, 1
        %s212 = scalar_lea.sflag [#allocation3], %s211
        %s213 = sand.u32 %s30, 1
        %s214 = smul.addr %s213, 16
        %s215 = scalar_lea.vmem [#allocation2], %s214
        %p216 = pneg %p43
        %p217 = pneg %p40
        %p218 = pneg %p64
        %p219 = pneg %p61
        %p220 = pneg %p85
        %p221 = pneg %p82
        %p222 = pneg %p106
        %p223 = pneg %p103
        %p224 = pneg %p132
        %p225 = pneg %p129
        %s226 = sand.u32 %s119, 1
        %s227 = scalar_lea.sflag [#allocation4], %s226
        %s228 = sand.u32 %s119, 1
        %s229 = smul.addr %s228, 16
        %s230 = scalar_lea.vmem [#allocation7], %s229
        %v231 = vld [vmem:[#allocation5] sm:$0xff]
        %v232 = vld [vmem:[#allocation5 + $0x8] sm:$0xff]
        %v233 = vld [vmem:[%s2] sm:$0x1]
        %v234 = vld [vmem:[%s3] sm:$0x1]
        %v235 = vld [vmem:[%s202] sm:$0xff]
        %v236 = vld [vmem:[%s202 + $0x8] sm:$0xff]
        %vm237 = vcmask 261120
        %v238 = vsel %vm237, %v235, 0.0
        %239 = vadd.xlane.f32.xlu0 %v238
        %v240 = vpop.xlane.xlu0 %239
        %v241 = vsel %vm237, %v236, 0.0
        %242 = vadd.xlane.f32.xlu0 %v241
        %v243 = vpop.xlane.xlu0 %242
        %v244 = vrcp.pop 32.0
        %v245 = vmul.f32 %v240, %v244
        %v246 = vmul.f32 %v243, %v244
        %v247 = vsub.f32 %v235, %v245
        %v248 = vsub.f32 %v236, %v246
        %v249 = vmul.f32 %v247, %v247
        %v250 = vmul.f32 %v248, %v248
        %v251 = vsel %vm237, %v249, 0.0
        %252 = vadd.xlane.f32.xlu0 %v251
        %v253 = vpop.xlane.xlu0 %252
        %v254 = vsel %vm237, %v250, 0.0
        %255 = vadd.xlane.f32.xlu0 %v254
        %v256 = vpop.xlane.xlu0 %255
        %v257 = vmul.f32 %v253, %v244
        %v258 = vmul.f32 %v256, %v244
        %v259 = vadd.f32 %v257, 1e-05
        %v260 = vadd.f32 %v258, 1e-05
        %v261 = vrsqrt.pop %v259
        %v262 = vrsqrt.pop %v260
        %v263 = vmul.f32 %v247, %v261
        %v264 = vmul.f32 %v248, %v262
        %v266 = vlaneseq
        %v267 = vshrl.u32 %v266, 7
        %v268 = vsub.s32 0, %v267
        %v269 = vrot.slane %v233, %v268
        %v271 = vmul.f32 %v263, %v269
        %v272 = vmul.f32 %v264, %v269
        %v274 = vlaneseq
        %v275 = vshrl.u32 %v274, 7
        %v276 = vsub.s32 0, %v275
        %v277 = vrot.slane %v234, %v276
        %v279 = vadd.f32 %v271, %v277
        %v280 = vadd.f32 %v272, %v277
        %vm281 = vcmask 130048
        %v283 = vsel %vm281, %v231, 0
        %v286 = vsel %vm281, %v232, 0
        %288 = vmatprep.subr.mxu0 0.0
        %289 = vmatpush1.msra.mxu0 0.0
        %290 = vmatprep.subr.mxu0 0.0
        %291 = vmatpush1.msra.mxu0 0.0
        %292 = vmatprep.subr.mxu0 0.0
        %293 = vmatpush1.msra.mxu0 0.0
        %294 = vmatprep.subr.mxu0 0.0
        %295 = vmatpush1.msra.mxu0 0.0
        %296 = vmatprep.subr.mxu0 0.0
        %297 = vmatpush1.msra.mxu0 0.0
        %298 = vmatprep.subr.mxu0 0.0
        %299 = vmatpush1.msra.mxu0 0.0
        %300 = vmatprep.subr.mxu0 0.0
        %301 = vmatpush1.msra.mxu0 0.0
        %302 = vmatprep.subr.mxu0 0.0
        %303 = vmatpush1.msra.mxu0 0.0
        %304 = vmatprep.subr.mxu0 0.0
        %305 = vmatpush1.msra.mxu0 0.0
        %306 = vmatprep.subr.mxu0 0.0
        %307 = vmatpush1.msra.mxu0 0.0
        %308 = vmatprep.subr.mxu0 0.0
        %309 = vmatpush1.msra.mxu0 0.0
        %310 = vmatprep.subr.mxu0 0.0
        %311 = vmatpush1.msra.mxu0 0.0
        %312 = vmatprep.subr.mxu0 0.0
        %313 = vmatpush1.msra.mxu0 0.0
        %314 = vmatprep.subr.mxu0 0.0
        %315 = vmatpush1.msra.mxu0 0.0
        %316 = vmatprep.subr.mxu0 0.0
        %317 = vmatpush1.msra.mxu0 %v280
        %318 = vmatprep.subr.mxu0 0.0
        %319 = vmatpush1.msra.mxu0 %v279
        %320 = vmatprep.subr.mxu0 0.0
        %321 = vmatpush2.msra.mxu0 0.0
        %322 = vmatprep.subr.mxu0 0.0
        %323 = vmatpush2.msra.mxu0 0.0
        %324 = vmatprep.subr.mxu0 0.0
        %325 = vmatpush2.msra.mxu0 0.0
        %326 = vmatprep.subr.mxu0 0.0
        %327 = vmatpush2.msra.mxu0 0.0
        %328 = vmatprep.subr.mxu0 0.0
        %329 = vmatpush2.msra.mxu0 0.0
        %330 = vmatprep.subr.mxu0 0.0
        %331 = vmatpush2.msra.mxu0 0.0
        %332 = vmatprep.subr.mxu0 0.0
        %333 = vmatpush2.msra.mxu0 0.0
        %334 = vmatprep.subr.mxu0 0.0
        %335 = vmatpush2.msra.mxu0 0.0
        %336 = vmatprep.subr.mxu0 0.0
        %337 = vmatpush2.msra.mxu0 0.0
        %338 = vmatprep.subr.mxu0 0.0
        %339 = vmatpush2.msra.mxu0 0.0
        %340 = vmatprep.subr.mxu0 0.0
        %341 = vmatpush2.msra.mxu0 0.0
        %342 = vmatprep.subr.mxu0 0.0
        %343 = vmatpush2.msra.mxu0 0.0
        %344 = vmatprep.subr.mxu0 0.0
        %345 = vmatpush2.msra.mxu0 0.0
        %346 = vmatprep.subr.mxu0 0.0
        %347 = vmatpush2.msra.mxu0 0.0
        %348 = vmatprep.subr.mxu0 0.0
        %349 = vmatpush2.msra.mxu0 0.0
        %350 = vmatprep.subr.mxu0 0.0
        %351 = vmatpush2.msra.mxu0 0.0
        %352 = vmatprep.mubr.f32.mxu0 0.0
        %353 = vmatmul.mubr.f32.gmra.mxu0 %v283
        %v354 = vpop.f32.mrf.mxu0
        %v355 = vadd.f32 0.0, %v354
        %v356 = vpop.f32.mrf.mxu0
        %357 = vmatprep.mubr.f32.mxu0 0.0
        %358 = vmatmul.mubr.f32.gmra.mxu0 %v286
        %v359 = vpop.f32.mrf.mxu0
        %v360 = vadd.f32 0.0, %v359
        %v361 = vpop.f32.mrf.mxu0
        %362 = vdwg.mxu0
        %363 = vst.msk [vmem:[%s230] sm:$0xff] %vm237, %v355
        %364 = vst.msk [vmem:[%s230 + $0x8] sm:$0xff] %vm237, %v360
        %s365 = sand.u32 %s119, 1
        %s366 = scalar_lea.sflag [#allocation4], %s365
        %s367 = sand.u32 %s119, 1
        %s368 = smul.addr %s367, 16
        %s369 = scalar_lea.vmem [#allocation7], %s368
        // Predicated region
        $region45: #{tpu_custom_call.1} parent=35 // pred_check
          %p370 = pneg %p129
        $region46: #{tpu_custom_call.1} parent=35 // pred_check_branch
          %372 = sbr.rel (%p370) target = $region48
        $region47: #{tpu_custom_call.1} parent=35 // pred_region
          %s374 = ssub.s32 256, 256
          %375 = vsyncadd %s366, %s374
          %s376 = smul.addr %s22, 2
          %s377 = smul.addr %s376, 128
          %s378 = scalar_lea.hbm %s4, %s377
          %s379 = sshll.u32 %s369, 4
          %s380 = int_to_ptr.vmem [resolvable:$true] %s379
          %385 = dma.vmem_to_hbm [thread:$0]  %s380, 256, %s378, %s366, 128, 128, 8
        $region48: #{tpu_custom_call.1} parent=35 // pred_fallthru
          _
      $region36: #{tpu_custom_call.1} parent=5 // pred_fallthru
        _
      %p386 = scmp.le.s32.totalorder 2, %s17
      // Predicated region
      $region49: #{tpu_custom_call.1} parent=5 // pred_check
        %p387 = pneg %p386
      $region50: #{tpu_custom_call.1} parent=5 // pred_check_branch
        %389 = sbr.rel (%p387) target = $region52
      $region51: #{tpu_custom_call.1} parent=5 // pred_region
        %s390 = ssub.s32 %s17, 2
        // Predicated region
        $region53: #{tpu_custom_call.1} parent=51 // pred_check
          %p391 = pneg %p135
        $region54: #{tpu_custom_call.1} parent=51 // pred_check_branch
          %393 = sbr.rel (%p391) target = $region56
        $region55: #{tpu_custom_call.1} parent=51 // pred_region
          %s394 = sand.u32 %s120, 1
          %s395 = scalar_lea.sflag [#allocation4], %s394
          %s396 = sand.u32 %s120, 1
          %s397 = smul.addr %s396, 16
          %s398 = scalar_lea.vmem [#allocation7], %s397
          %399 = dma.done %s395, 256
        $region56: #{tpu_custom_call.1} parent=51 // pred_fallthru
          _
      $region52: #{tpu_custom_call.1} parent=5 // pred_fallthru
        _
    $region6: #{tpu_custom_call.1} parent=1 // loop_footer
      %s21 = sadd.s32 1, %s17
    $region7: #{tpu_custom_call.1} parent=1 // loop_footer_branch
      %16 = sbr.rel target = $region3
    $region8: #{tpu_custom_call.1} parent=1 // loop_exit
      _
    %400 = vsyncpa [#allocation3], 1
    %s401 = scalar_lea.sflag [#allocation3], 1
    %402 = vsyncpa %s401, 1
    %403 = vsyncpa [#allocation6], 1
    %404 = vsyncpa [#allocation4], 1
    %s405 = scalar_lea.sflag [#allocation4], 1
    %406 = vsyncpa %s405, 1

</llo_original>
